<compile_context>
chip_gen: v5e
topology: v5e:2x2
jax: 0.10.0
libtpu: 0.0.40
codegen_flags: <defaults>
</compile_context>

<pallas_src>
import numpy as np
import jax
import jax.numpy as jnp
from jax.experimental import pallas as pl
from jax.experimental.pallas import tpu as pltpu

# ----------------------------- model config ---------------------------------
B = 2          # demo batch (wrapper handles any B; B<=8 or a multiple of 8)
T = 8          # sequence length (constrained by fc1, see header)
F = 4          # config.num_feature
H = 8          # config.hidden_size (constrained by fc1, see header)
KF = 5         # config.filter_size
PAD = 2        # conv padding
NFILT = 4      # config.num_filter
NLAB = 3       # config.num_labels
PT = T // 2    # pooled "time" extent   (= 4)
PH = H // 2    # pooled "hidden" extent (= 4)
FLAT = NFILT * PT * PH       # 64 = num_filter * 4 * 4
FC1 = 128
FC2 = 64
HALF = PH * NFILT            # 16: one h-parity group of conv output columns
CW_COLS = 2 * HALF           # 32: conv-matmul output columns (h%2, h//2, f)
OUT_LANES = 128              # lane-padded logits; host slices [:, :NLAB]

# packed bf16 weight buffer layout (rows x 128 lanes); all offsets 16-aligned
ROW_W4 = 0      # 16 rows : 4-step block-diag W_ih expansion (16, 128)
ROW_WHH = 16    #  8 rows : W_hh                              (8, 32)
ROW_CW = 32     # 40 rows : conv Toeplitz matmul weight       (40, 32)
ROW_W1 = 80     # 64 rows : fc1 weight (flatten perm folded)  (64, 128)
ROW_W2 = 144    # 128 rows: fc2 weight                        (128, 64)
ROW_W3 = 272    # 64 rows : output weight, lane-padded        (64, 128)
WROWS = 336

# packed f32 bias buffer layout (8 rows x 128 lanes)
BROW_LB, BROW_CB, BROW_B1, BROW_B2, BROW_B3 = 0, 1, 2, 3, 4


# ----------------------------- Pallas kernel --------------------------------
def make_kernel(BT):
    """Kernel for one batch tile of BT rows."""

    def kernel(x_ref, w_ref, b_ref, out_ref):
        f32 = jnp.float32
        bf16 = jnp.bfloat16

        # ---- LSTM (single layer, h0 = c0 = 0), unrolled over T ---------------
        # Input projection hoisted out of the recurrence: x is (BT, T*F) with
        # lane t*F + f; W4 is a 4-step block-diagonal expansion of W_ih, so two
        # (BT,16)@(16,128) dots give the input gates for steps 0..3 and 4..7.
        xb = x_ref[...].astype(bf16)                                   # (BT, 32)
        w4 = w_ref[ROW_W4:ROW_W4 + 4 * F, :]                           # (16, 128)
        lb4 = b_ref[BROW_LB:BROW_LB + 1, :]                            # lb tiled x4
        xg_lo = jnp.dot(xb[:, 0:4 * F], w4, preferred_element_type=f32) + lb4
        xg_hi = jnp.dot(xb[:, 4 * F:8 * F], w4, preferred_element_type=f32) + lb4
        whh = w_ref[ROW_WHH:ROW_WHH + H, 0:4 * H]                      # (8, 32)

        h = jnp.zeros((BT, H), f32)
        c = jnp.zeros((BT, H), f32)
        hs = []
        for t in range(T):                   # keep unrolled (LLO visibility)
            xg = xg_lo if t < 4 else xg_hi
            s = (t % 4) * 4 * H
            gates = xg[:, s:s + 4 * H] + jnp.dot(h.astype(bf16), whh,
                                                 preferred_element_type=f32)
            sig = jax.nn.sigmoid(gates[:, 0:3 * H])                    # i | f | o
            g_g = jnp.tanh(gates[:, 3 * H:4 * H])                      # g
            c = sig[:, H:2 * H] * c + sig[:, 0:H] * g_g
            h = sig[:, 2 * H:3 * H] * jnp.tanh(c)
            hs.append(h)                     # stays in vregs (no VMEM scratch)

        # ---- Conv2d(1, NFILT, 5x5, pad=2) as one matmul -----------------------
        # Row (t*BT + b) of the LHS holds the 5 time-shifted padded rows
        # lane-concatenated; cw is the host-built Toeplitz-in-h expansion of the
        # 5x5 kernel (h-padding folded in).
        zrow = jnp.zeros((BT, H), f32)
        rows = [zrow, zrow] + hs + [zrow, zrow]                        # 12 rows
        big = jnp.concatenate(
            [jnp.concatenate([rows[t + kh] for kh in range(KF)], axis=1)
             for t in range(T)], axis=0)                               # (T*BT, 40)
        cw = w_ref[ROW_CW:ROW_CW + KF * H, 0:CW_COLS]                  # (40, 32)
        cb = b_ref[BROW_CB:BROW_CB + 1, 0:CW_COLS]                     # (1, 32)
        conv = jnp.dot(big.astype(bf16), cw, preferred_element_type=f32) + cb
        conv = jnp.maximum(conv, 0.0)                                  # ReLU

        # ---- MaxPool2d(2,2) ---------------------------------------------------
        # conv columns are (h%2)*16 + (h//2)*4 + f -> h-pool is one lane-slice
        # max; t-pool is a max of the even/odd time rows (rows are t*BT + b).
        mh = jnp.maximum(conv[:, 0:HALF], conv[:, HALF:2 * HALF])      # (T*BT, 16)
        even = jnp.concatenate(
            [mh[(2 * pt) * BT:(2 * pt + 1) * BT, :] for pt in range(PT)], axis=1)
        odd = jnp.concatenate(
            [mh[(2 * pt + 1) * BT:(2 * pt + 2) * BT, :] for pt in range(PT)], axis=1)
        feat = jnp.maximum(even, odd)                                  # (BT, 64)
        # feat column order is pt*16 + ph*4 + f; the PyTorch flatten permutation
        # is folded into w1 host-side.

        # ---- fc1 -> ReLU -> fc2 -> ReLU -> output (dropout == identity) -------
        w1 = w_ref[ROW_W1:ROW_W1 + FLAT, :]                            # (64, 128)
        b1 = b_ref[BROW_B1:BROW_B1 + 1, :]
        h1 = jnp.maximum(jnp.dot(feat.astype(bf16), w1,
                                 preferred_element_type=f32) + b1, 0.0)
        w2 = w_ref[ROW_W2:ROW_W2 + FC1, 0:FC2]                         # (128, 64)
        b2 = b_ref[BROW_B2:BROW_B2 + 1, 0:FC2]
        h2 = jnp.maximum(jnp.dot(h1.astype(bf16), w2,
                                 preferred_element_type=f32) + b2, 0.0)
        w3 = w_ref[ROW_W3:ROW_W3 + FC2, :]                             # (64, 128) lane-padded
        b3 = b_ref[BROW_B3:BROW_B3 + 1, :]
        out_ref[...] = jnp.dot(h2.astype(bf16), w3,
                               preferred_element_type=f32) + b3        # (BT, 128)

    return kernel


# ----------------------------- host-side parameter packing -------------------
def prepare_kernel_params(raw):
    """Reorder / expand PyTorch-layout weights and pack into two dense buffers."""
    # LSTM: permute gate columns from (i, f, g, o) to (i, f, o, g).
    gp = np.concatenate([np.arange(0, H), np.arange(H, 2 * H),
                         np.arange(3 * H, 4 * H), np.arange(2 * H, 3 * H)])
    wih_r = np.asarray(raw["w_ih"]).T[:, gp]                       # (F, 4H)
    whh_r = np.asarray(raw["w_hh"]).T[:, gp]                       # (H, 4H)
    lb_r = (np.asarray(raw["b_ih"]) + np.asarray(raw["b_hh"]))[gp]  # (4H,)

    # 4-step block-diagonal expansion of W_ih: (4F, 4*4H) = (16, 128).
    W4 = np.zeros((4 * F, 128), np.float32)
    for s in range(4):
        W4[s * F:(s + 1) * F, s * 4 * H:(s + 1) * 4 * H] = wih_r

    # Conv: Toeplitz-in-h expansion.  M[kh*H + j, col(h,f)] = w[f, kh, j+PAD-h]
    # with col(h,f) = (h%2)*16 + (h//2)*4 + f (parity-grouped for easy pooling).
    conv_w4 = np.asarray(raw["conv_w4"])                           # (NFILT,1,KF,KF)
    M = np.zeros((KF * H, CW_COLS), np.float32)
    for kh in range(KF):
        for j in range(H):
            for hh in range(H):
                kw = j + PAD - hh
                if 0 <= kw < KF:
                    base = (hh % 2) * HALF + (hh // 2) * NFILT
                    M[kh * H + j, base:base + NFILT] = conv_w4[:, 0, kh, kw]

    # fc1: fold the PyTorch flatten order (f*16 + pt*4 + ph) into the weights;
    # kernel feature order is pt*16 + ph*4 + f.
    perm = np.zeros(FLAT, np.int32)
    for pt in range(PT):
        for ph in range(PH):
            for ff in range(NFILT):
                perm[pt * HALF + ph * NFILT + ff] = ff * PT * PH + pt * PH + ph
    w1 = np.asarray(raw["W1"]).T[perm, :]                          # (64, 128)
    w2 = np.asarray(raw["W2"]).T                                   # (128, 64)
    w3 = np.asarray(raw["W3"]).T                                   # (64, 3)

    # Packed bf16 weight slab (WROWS, 128) -> one dense DMA, static in-kernel slices.
    Wb = np.zeros((WROWS, 128), np.float32)
    Wb[ROW_W4:ROW_W4 + 4 * F, :] = W4
    Wb[ROW_WHH:ROW_WHH + H, 0:4 * H] = whh_r
    Wb[ROW_CW:ROW_CW + KF * H, 0:CW_COLS] = M
    Wb[ROW_W1:ROW_W1 + FLAT, 0:FC1] = w1
    Wb[ROW_W2:ROW_W2 + FC1, 0:FC2] = w2
    Wb[ROW_W3:ROW_W3 + FC2, 0:NLAB] = w3          # lanes NLAB:128 stay zero

    # Packed f32 bias slab (8, 128) -> second dense DMA.
    Bb = np.zeros((8, 128), np.float32)
    Bb[BROW_LB, :] = np.tile(lb_r, 4)
    Bb[BROW_CB, 0:CW_COLS] = np.tile(np.asarray(raw["conv_b"]), 2 * PH)
    Bb[BROW_B1, 0:FC1] = np.asarray(raw["b1"])
    Bb[BROW_B2, 0:FC2] = np.asarray(raw["b2"])
    Bb[BROW_B3, 0:NLAB] = np.asarray(raw["b3"])   # lanes NLAB:128 stay zero

    return dict(W=jnp.asarray(Wb, dtype=jnp.bfloat16),
                B=jnp.asarray(Bb, dtype=jnp.float32))


# ----------------------------- wrapper ---------------------------------------
def lcn2018_forward(x, kp):
    bsz = x.shape[0]
    # Batch tile: full batch when small, else 8-row tiles on a "parallel" grid
    # axis (sharded across TensorCores on v7x; per-tile arrays stay vreg-sized).
    bt = bsz if bsz <= 8 else 8
    assert bsz % bt == 0, "batch must be <= 8 or a multiple of 8"
    nb = bsz // bt

    x2 = x.reshape(bsz, T * F)        # lane = t*F + f (row-major flatten, free)
    out = pl.pallas_call(
        make_kernel(bt),
        out_shape=jax.ShapeDtypeStruct((bsz, OUT_LANES), jnp.float32),
        grid=(nb,),
        in_specs=[pl.BlockSpec((bt, T * F), lambda i: (i, 0)),
                  pl.BlockSpec((WROWS, 128), lambda i: (0, 0)),
                  pl.BlockSpec((8, 128), lambda i: (0, 0))],
        out_specs=pl.BlockSpec((bt, OUT_LANES), lambda i: (i, 0)),
        compiler_params=pltpu.CompilerParams(dimension_semantics=("parallel",)),
    )(x2, kp["W"], kp["B"])
    return out[:, :NLAB]


# ----------------------------- pure-JAX reference ----------------------------
# Mirrors the kernel's MXU numerics: bf16 matmul operands, f32 accumulation.
def reference(x, raw):
    f32 = jnp.float32
    bf = lambda a: jnp.asarray(a, dtype=jnp.bfloat16)
    bsz = x.shape[0]
    wih_t = jnp.asarray(raw["w_ih"]).T
    whh_t = jnp.asarray(raw["w_hh"]).T
    lb = (raw["b_ih"] + raw["b_hh"]).astype(f32)

    h = jnp.zeros((bsz, H), f32)
    c = jnp.zeros((bsz, H), f32)
    hs = []
    for t in range(T):
        g = (jnp.dot(bf(x[:, t, :]), bf(wih_t), preferred_element_type=f32) + lb
             + jnp.dot(bf(h), bf(whh_t), preferred_element_type=f32))
        i_g = jax.nn.sigmoid(g[:, 0:H])
        f_g = jax.nn.sigmoid(g[:, H:2 * H])
        g_g = jnp.tanh(g[:, 2 * H:3 * H])
        o_g = jax.nn.sigmoid(g[:, 3 * H:4 * H])
        c = f_g * c + i_g * g_g
        h = o_g * jnp.tanh(c)
        hs.append(h)
    seq = jnp.stack(hs, axis=1)                      # (B, T, H)
    img = seq[:, None, :, :]                         # (B, 1, T, H)  NCHW

    conv = jax.lax.conv_general_dilated(
        bf(img), bf(jnp.asarray(raw["conv_w4"])), window_strides=(1, 1),
        padding=[(PAD, PAD), (PAD, PAD)],
        dimension_numbers=("NCHW", "OIHW", "NCHW"),
        preferred_element_type=f32)
    conv = jnp.maximum(conv + raw["conv_b"].reshape(1, NFILT, 1, 1), 0.0)
    pooled = jax.lax.reduce_window(conv, -jnp.inf, jax.lax.max,
                                   (1, 1, 2, 2), (1, 1, 2, 2), "VALID")
    flat = pooled.reshape(bsz, -1)                   # PyTorch flatten order

    h1 = jnp.maximum(jnp.dot(bf(flat), bf(jnp.asarray(raw["W1"]).T),
                             preferred_element_type=f32) + raw["b1"], 0.0)
    h2 = jnp.maximum(jnp.dot(bf(h1), bf(jnp.asarray(raw["W2"]).T),
                             preferred_element_type=f32) + raw["b2"], 0.0)
    return jnp.dot(bf(h2), bf(jnp.asarray(raw["W3"]).T),
                   preferred_element_type=f32) + raw["b3"]


# ----------------------------- main ------------------------------------------
if __name__ == "__main__":
    key = jax.random.PRNGKey(0)
    ks = jax.random.split(key, 13)

    def rnd(k, shape, scale=0.2):
        return jax.random.normal(k, shape, dtype=jnp.float32) * scale

    # Parameter shapes exactly as nn.LSTM / nn.Conv2d / nn.Linear would create.
    raw = dict(
        w_ih=rnd(ks[0], (4 * H, F)),         # LSTM weight_ih_l0
        w_hh=rnd(ks[1], (4 * H, H)),         # LSTM weight_hh_l0
        b_ih=rnd(ks[2], (4 * H,)),
        b_hh=rnd(ks[3], (4 * H,)),
        conv_w4=rnd(ks[4], (NFILT, 1, KF, KF)),
        conv_b=rnd(ks[5], (NFILT,)),
        W1=rnd(ks[6], (FC1, FLAT)), b1=rnd(ks[7], (FC1,)),
        W2=rnd(ks[8], (FC2, FC1)), b2=rnd(ks[9], (FC2,)),
        W3=rnd(ks[10], (NLAB, FC2)), b3=rnd(ks[11], (NLAB,)),
    )
    kparams = prepare_kernel_params(raw)

    x = jax.random.normal(ks[12], (B, T, F), dtype=jnp.float32)

    out = jax.jit(lambda xx: lcn2018_forward(xx, kparams))(x)
    out = jax.block_until_ready(out)
    assert out.shape == (B, NLAB) and out.dtype == jnp.float32

    ref = reference(x, raw)
    max_err = float(jnp.max(jnp.abs(out - ref)))
    # Reference uses the same bf16-operand / f32-accumulate matmul numerics as
    # the kernel, so remaining differences are accumulation-order / EUP-level.
    if max_err > 1e-2:
        raise AssertionError(f"kernel/reference mismatch, max|err|={max_err}")

    print("KERNEL_OK")
</pallas_src>

<mosaic_0001>
module attributes {stable_mosaic.version = 11 : i64} {
  func.func @kernel(%arg0: i32, %arg1: memref<2x32xf32, #tpu.memory_space<vmem>>, %arg2: memref<336x128xbf16, #tpu.memory_space<vmem>>, %arg3: memref<8x128xf32, #tpu.memory_space<vmem>>, %arg4: memref<2x128xf32, #tpu.memory_space<vmem>>) attributes {dimension_semantics = [#tpu.dimension_semantics<parallel>], iteration_bounds = array<i64: 1>, scalar_prefetch = 0 : i64, scratch_operands = 0 : i64, tpu.core_type = #tpu.core_type<tc>, window_params = [{transform_indices = @transform_0, window_bounds = array<i64: 2, 32>}, {pipeline_mode = #tpu.pipeline_mode<synchronous>, transform_indices = @transform_1, window_bounds = array<i64: 336, 128>}, {pipeline_mode = #tpu.pipeline_mode<synchronous>, transform_indices = @transform_2, window_bounds = array<i64: 8, 128>}, {transform_indices = @transform_3, window_bounds = array<i64: 2, 128>}]} {
    %c0 = arith.constant 0 : index
    %c0_0 = arith.constant 0 : index
    %0 = vector.load %arg1[%c0, %c0_0] : memref<2x32xf32, #tpu.memory_space<vmem>>, vector<2x32xf32>
    %1 = arith.truncf %0 : vector<2x32xf32> to vector<2x32xbf16>
    %c0_1 = arith.constant 0 : index
    %c0_2 = arith.constant 0 : index
    %2 = vector.load %arg2[%c0_1, %c0_2] : memref<336x128xbf16, #tpu.memory_space<vmem>>, vector<16x128xbf16>
    %c0_3 = arith.constant 0 : index
    %c0_4 = arith.constant 0 : index
    %3 = vector.load %arg3[%c0_3, %c0_4] : memref<8x128xf32, #tpu.memory_space<vmem>>, vector<1x128xf32>
    %4 = vector.extract_strided_slice %1 {offsets = [0, 0], sizes = [2, 16], strides = [1, 1]} : vector<2x32xbf16> to vector<2x16xbf16>
    %cst = arith.constant dense<0.000000e+00> : vector<2x128xf32>
    %5 = tpu.matmul %4, %2, %cst {dimension_numbers = #tpu.dot_dimension_numbers<[1], [0], [0], [1], [0, 0, 1, 1], [], []>} : vector<2x16xbf16>, vector<16x128xbf16>, vector<2x128xf32> -> vector<2x128xf32>
    %6 = vector.broadcast %3 : vector<1x128xf32> to vector<2x128xf32>
    %7 = arith.addf %5, %6 : vector<2x128xf32>
    %8 = vector.extract_strided_slice %1 {offsets = [0, 16], sizes = [2, 16], strides = [1, 1]} : vector<2x32xbf16> to vector<2x16xbf16>
    %cst_5 = arith.constant dense<0.000000e+00> : vector<2x128xf32>
    %9 = tpu.matmul %8, %2, %cst_5 {dimension_numbers = #tpu.dot_dimension_numbers<[1], [0], [0], [1], [0, 0, 1, 1], [], []>} : vector<2x16xbf16>, vector<16x128xbf16>, vector<2x128xf32> -> vector<2x128xf32>
    %10 = vector.broadcast %3 : vector<1x128xf32> to vector<2x128xf32>
    %11 = arith.addf %9, %10 : vector<2x128xf32>
    %c16 = arith.constant 16 : index
    %c0_6 = arith.constant 0 : index
    %12 = vector.load %arg2[%c16, %c0_6] : memref<336x128xbf16, #tpu.memory_space<vmem>>, vector<8x32xbf16>
    %cst_7 = arith.constant 0.000000e+00 : f32
    %13 = vector.broadcast %cst_7 : f32 to vector<2x8xf32>
    %cst_8 = arith.constant 0.000000e+00 : f32
    %14 = vector.broadcast %cst_8 : f32 to vector<2x8xf32>
    %15 = vector.extract_strided_slice %7 {offsets = [0, 0], sizes = [2, 32], strides = [1, 1]} : vector<2x128xf32> to vector<2x32xf32>
    %16 = arith.truncf %13 : vector<2x8xf32> to vector<2x8xbf16>
    %cst_9 = arith.constant dense<0.000000e+00> : vector<2x32xf32>
    %17 = tpu.matmul %16, %12, %cst_9 {dimension_numbers = #tpu.dot_dimension_numbers<[1], [0], [0], [1], [0, 0, 1, 1], [], []>} : vector<2x8xbf16>, vector<8x32xbf16>, vector<2x32xf32> -> vector<2x32xf32>
    %18 = arith.addf %15, %17 : vector<2x32xf32>
    %19 = vector.extract_strided_slice %18 {offsets = [0, 0], sizes = [2, 24], strides = [1, 1]} : vector<2x32xf32> to vector<2x24xf32>
    %20 = arith.negf %19 : vector<2x24xf32>
    %21 = math.exp %20 : vector<2x24xf32>
    %cst_10 = arith.constant 1.000000e+00 : f32
    %22 = vector.broadcast %cst_10 : f32 to vector<2x24xf32>
    %23 = arith.addf %22, %21 : vector<2x24xf32>
    %24 = arith.divf %22, %23 : vector<2x24xf32>
    %25 = vector.extract_strided_slice %18 {offsets = [0, 24], sizes = [2, 8], strides = [1, 1]} : vector<2x32xf32> to vector<2x8xf32>
    %26 = math.tanh %25 : vector<2x8xf32>
    %27 = vector.extract_strided_slice %24 {offsets = [0, 8], sizes = [2, 8], strides = [1, 1]} : vector<2x24xf32> to vector<2x8xf32>
    %28 = arith.mulf %27, %14 : vector<2x8xf32>
    %29 = vector.extract_strided_slice %24 {offsets = [0, 0], sizes = [2, 8], strides = [1, 1]} : vector<2x24xf32> to vector<2x8xf32>
    %30 = arith.mulf %29, %26 : vector<2x8xf32>
    %31 = arith.addf %28, %30 : vector<2x8xf32>
    %32 = vector.extract_strided_slice %24 {offsets = [0, 16], sizes = [2, 8], strides = [1, 1]} : vector<2x24xf32> to vector<2x8xf32>
    %33 = math.tanh %31 : vector<2x8xf32>
    %34 = arith.mulf %32, %33 : vector<2x8xf32>
    %35 = vector.extract_strided_slice %7 {offsets = [0, 32], sizes = [2, 32], strides = [1, 1]} : vector<2x128xf32> to vector<2x32xf32>
    %36 = arith.truncf %34 : vector<2x8xf32> to vector<2x8xbf16>
    %cst_11 = arith.constant dense<0.000000e+00> : vector<2x32xf32>
    %37 = tpu.matmul %36, %12, %cst_11 {dimension_numbers = #tpu.dot_dimension_numbers<[1], [0], [0], [1], [0, 0, 1, 1], [], []>} : vector<2x8xbf16>, vector<8x32xbf16>, vector<2x32xf32> -> vector<2x32xf32>
    %38 = arith.addf %35, %37 : vector<2x32xf32>
    %39 = vector.extract_strided_slice %38 {offsets = [0, 0], sizes = [2, 24], strides = [1, 1]} : vector<2x32xf32> to vector<2x24xf32>
    %40 = arith.negf %39 : vector<2x24xf32>
    %41 = math.exp %40 : vector<2x24xf32>
    %cst_12 = arith.constant 1.000000e+00 : f32
    %42 = vector.broadcast %cst_12 : f32 to vector<2x24xf32>
    %43 = arith.addf %42, %41 : vector<2x24xf32>
    %44 = arith.divf %42, %43 : vector<2x24xf32>
    %45 = vector.extract_strided_slice %38 {offsets = [0, 24], sizes = [2, 8], strides = [1, 1]} : vector<2x32xf32> to vector<2x8xf32>
    %46 = math.tanh %45 : vector<2x8xf32>
    %47 = vector.extract_strided_slice %44 {offsets = [0, 8], sizes = [2, 8], strides = [1, 1]} : vector<2x24xf32> to vector<2x8xf32>
    %48 = arith.mulf %47, %31 : vector<2x8xf32>
    %49 = vector.extract_strided_slice %44 {offsets = [0, 0], sizes = [2, 8], strides = [1, 1]} : vector<2x24xf32> to vector<2x8xf32>
    %50 = arith.mulf %49, %46 : vector<2x8xf32>
    %51 = arith.addf %48, %50 : vector<2x8xf32>
    %52 = vector.extract_strided_slice %44 {offsets = [0, 16], sizes = [2, 8], strides = [1, 1]} : vector<2x24xf32> to vector<2x8xf32>
    %53 = math.tanh %51 : vector<2x8xf32>
    %54 = arith.mulf %52, %53 : vector<2x8xf32>
    %55 = vector.extract_strided_slice %7 {offsets = [0, 64], sizes = [2, 32], strides = [1, 1]} : vector<2x128xf32> to vector<2x32xf32>
    %56 = arith.truncf %54 : vector<2x8xf32> to vector<2x8xbf16>
    %cst_13 = arith.constant dense<0.000000e+00> : vector<2x32xf32>
    %57 = tpu.matmul %56, %12, %cst_13 {dimension_numbers = #tpu.dot_dimension_numbers<[1], [0], [0], [1], [0, 0, 1, 1], [], []>} : vector<2x8xbf16>, vector<8x32xbf16>, vector<2x32xf32> -> vector<2x32xf32>
    %58 = arith.addf %55, %57 : vector<2x32xf32>
    %59 = vector.extract_strided_slice %58 {offsets = [0, 0], sizes = [2, 24], strides = [1, 1]} : vector<2x32xf32> to vector<2x24xf32>
    %60 = arith.negf %59 : vector<2x24xf32>
    %61 = math.exp %60 : vector<2x24xf32>
    %cst_14 = arith.constant 1.000000e+00 : f32
    %62 = vector.broadcast %cst_14 : f32 to vector<2x24xf32>
    %63 = arith.addf %62, %61 : vector<2x24xf32>
    %64 = arith.divf %62, %63 : vector<2x24xf32>
    %65 = vector.extract_strided_slice %58 {offsets = [0, 24], sizes = [2, 8], strides = [1, 1]} : vector<2x32xf32> to vector<2x8xf32>
    %66 = math.tanh %65 : vector<2x8xf32>
    %67 = vector.extract_strided_slice %64 {offsets = [0, 8], sizes = [2, 8], strides = [1, 1]} : vector<2x24xf32> to vector<2x8xf32>
    %68 = arith.mulf %67, %51 : vector<2x8xf32>
    %69 = vector.extract_strided_slice %64 {offsets = [0, 0], sizes = [2, 8], strides = [1, 1]} : vector<2x24xf32> to vector<2x8xf32>
    %70 = arith.mulf %69, %66 : vector<2x8xf32>
    %71 = arith.addf %68, %70 : vector<2x8xf32>
    %72 = vector.extract_strided_slice %64 {offsets = [0, 16], sizes = [2, 8], strides = [1, 1]} : vector<2x24xf32> to vector<2x8xf32>
    %73 = math.tanh %71 : vector<2x8xf32>
    %74 = arith.mulf %72, %73 : vector<2x8xf32>
    %75 = vector.extract_strided_slice %7 {offsets = [0, 96], sizes = [2, 32], strides = [1, 1]} : vector<2x128xf32> to vector<2x32xf32>
    %76 = arith.truncf %74 : vector<2x8xf32> to vector<2x8xbf16>
    %cst_15 = arith.constant dense<0.000000e+00> : vector<2x32xf32>
    %77 = tpu.matmul %76, %12, %cst_15 {dimension_numbers = #tpu.dot_dimension_numbers<[1], [0], [0], [1], [0, 0, 1, 1], [], []>} : vector<2x8xbf16>, vector<8x32xbf16>, vector<2x32xf32> -> vector<2x32xf32>
    %78 = arith.addf %75, %77 : vector<2x32xf32>
    %79 = vector.extract_strided_slice %78 {offsets = [0, 0], sizes = [2, 24], strides = [1, 1]} : vector<2x32xf32> to vector<2x24xf32>
    %80 = arith.negf %79 : vector<2x24xf32>
    %81 = math.exp %80 : vector<2x24xf32>
    %cst_16 = arith.constant 1.000000e+00 : f32
    %82 = vector.broadcast %cst_16 : f32 to vector<2x24xf32>
    %83 = arith.addf %82, %81 : vector<2x24xf32>
    %84 = arith.divf %82, %83 : vector<2x24xf32>
    %85 = vector.extract_strided_slice %78 {offsets = [0, 24], sizes = [2, 8], strides = [1, 1]} : vector<2x32xf32> to vector<2x8xf32>
    %86 = math.tanh %85 : vector<2x8xf32>
    %87 = vector.extract_strided_slice %84 {offsets = [0, 8], sizes = [2, 8], strides = [1, 1]} : vector<2x24xf32> to vector<2x8xf32>
    %88 = arith.mulf %87, %71 : vector<2x8xf32>
    %89 = vector.extract_strided_slice %84 {offsets = [0, 0], sizes = [2, 8], strides = [1, 1]} : vector<2x24xf32> to vector<2x8xf32>
    %90 = arith.mulf %89, %86 : vector<2x8xf32>
    %91 = arith.addf %88, %90 : vector<2x8xf32>
    %92 = vector.extract_strided_slice %84 {offsets = [0, 16], sizes = [2, 8], strides = [1, 1]} : vector<2x24xf32> to vector<2x8xf32>
    %93 = math.tanh %91 : vector<2x8xf32>
    %94 = arith.mulf %92, %93 : vector<2x8xf32>
    %95 = vector.extract_strided_slice %11 {offsets = [0, 0], sizes = [2, 32], strides = [1, 1]} : vector<2x128xf32> to vector<2x32xf32>
    %96 = arith.truncf %94 : vector<2x8xf32> to vector<2x8xbf16>
    %cst_17 = arith.constant dense<0.000000e+00> : vector<2x32xf32>
    %97 = tpu.matmul %96, %12, %cst_17 {dimension_numbers = #tpu.dot_dimension_numbers<[1], [0], [0], [1], [0, 0, 1, 1], [], []>} : vector<2x8xbf16>, vector<8x32xbf16>, vector<2x32xf32> -> vector<2x32xf32>
    %98 = arith.addf %95, %97 : vector<2x32xf32>
    %99 = vector.extract_strided_slice %98 {offsets = [0, 0], sizes = [2, 24], strides = [1, 1]} : vector<2x32xf32> to vector<2x24xf32>
    %100 = arith.negf %99 : vector<2x24xf32>
    %101 = math.exp %100 : vector<2x24xf32>
    %cst_18 = arith.constant 1.000000e+00 : f32
    %102 = vector.broadcast %cst_18 : f32 to vector<2x24xf32>
    %103 = arith.addf %102, %101 : vector<2x24xf32>
    %104 = arith.divf %102, %103 : vector<2x24xf32>
    %105 = vector.extract_strided_slice %98 {offsets = [0, 24], sizes = [2, 8], strides = [1, 1]} : vector<2x32xf32> to vector<2x8xf32>
    %106 = math.tanh %105 : vector<2x8xf32>
    %107 = vector.extract_strided_slice %104 {offsets = [0, 8], sizes = [2, 8], strides = [1, 1]} : vector<2x24xf32> to vector<2x8xf32>
    %108 = arith.mulf %107, %91 : vector<2x8xf32>
    %109 = vector.extract_strided_slice %104 {offsets = [0, 0], sizes = [2, 8], strides = [1, 1]} : vector<2x24xf32> to vector<2x8xf32>
    %110 = arith.mulf %109, %106 : vector<2x8xf32>
    %111 = arith.addf %108, %110 : vector<2x8xf32>
    %112 = vector.extract_strided_slice %104 {offsets = [0, 16], sizes = [2, 8], strides = [1, 1]} : vector<2x24xf32> to vector<2x8xf32>
    %113 = math.tanh %111 : vector<2x8xf32>
    %114 = arith.mulf %112, %113 : vector<2x8xf32>
    %115 = vector.extract_strided_slice %11 {offsets = [0, 32], sizes = [2, 32], strides = [1, 1]} : vector<2x128xf32> to vector<2x32xf32>
    %116 = arith.truncf %114 : vector<2x8xf32> to vector<2x8xbf16>
    %cst_19 = arith.constant dense<0.000000e+00> : vector<2x32xf32>
    %117 = tpu.matmul %116, %12, %cst_19 {dimension_numbers = #tpu.dot_dimension_numbers<[1], [0], [0], [1], [0, 0, 1, 1], [], []>} : vector<2x8xbf16>, vector<8x32xbf16>, vector<2x32xf32> -> vector<2x32xf32>
    %118 = arith.addf %115, %117 : vector<2x32xf32>
    %119 = vector.extract_strided_slice %118 {offsets = [0, 0], sizes = [2, 24], strides = [1, 1]} : vector<2x32xf32> to vector<2x24xf32>
    %120 = arith.negf %119 : vector<2x24xf32>
    %121 = math.exp %120 : vector<2x24xf32>
    %cst_20 = arith.constant 1.000000e+00 : f32
    %122 = vector.broadcast %cst_20 : f32 to vector<2x24xf32>
    %123 = arith.addf %122, %121 : vector<2x24xf32>
    %124 = arith.divf %122, %123 : vector<2x24xf32>
    %125 = vector.extract_strided_slice %118 {offsets = [0, 24], sizes = [2, 8], strides = [1, 1]} : vector<2x32xf32> to vector<2x8xf32>
    %126 = math.tanh %125 : vector<2x8xf32>
    %127 = vector.extract_strided_slice %124 {offsets = [0, 8], sizes = [2, 8], strides = [1, 1]} : vector<2x24xf32> to vector<2x8xf32>
    %128 = arith.mulf %127, %111 : vector<2x8xf32>
    %129 = vector.extract_strided_slice %124 {offsets = [0, 0], sizes = [2, 8], strides = [1, 1]} : vector<2x24xf32> to vector<2x8xf32>
    %130 = arith.mulf %129, %126 : vector<2x8xf32>
    %131 = arith.addf %128, %130 : vector<2x8xf32>
    %132 = vector.extract_strided_slice %124 {offsets = [0, 16], sizes = [2, 8], strides = [1, 1]} : vector<2x24xf32> to vector<2x8xf32>
    %133 = math.tanh %131 : vector<2x8xf32>
    %134 = arith.mulf %132, %133 : vector<2x8xf32>
    %135 = vector.extract_strided_slice %11 {offsets = [0, 64], sizes = [2, 32], strides = [1, 1]} : vector<2x128xf32> to vector<2x32xf32>
    %136 = arith.truncf %134 : vector<2x8xf32> to vector<2x8xbf16>
    %cst_21 = arith.constant dense<0.000000e+00> : vector<2x32xf32>
    %137 = tpu.matmul %136, %12, %cst_21 {dimension_numbers = #tpu.dot_dimension_numbers<[1], [0], [0], [1], [0, 0, 1, 1], [], []>} : vector<2x8xbf16>, vector<8x32xbf16>, vector<2x32xf32> -> vector<2x32xf32>
    %138 = arith.addf %135, %137 : vector<2x32xf32>
    %139 = vector.extract_strided_slice %138 {offsets = [0, 0], sizes = [2, 24], strides = [1, 1]} : vector<2x32xf32> to vector<2x24xf32>
    %140 = arith.negf %139 : vector<2x24xf32>
    %141 = math.exp %140 : vector<2x24xf32>
    %cst_22 = arith.constant 1.000000e+00 : f32
    %142 = vector.broadcast %cst_22 : f32 to vector<2x24xf32>
    %143 = arith.addf %142, %141 : vector<2x24xf32>
    %144 = arith.divf %142, %143 : vector<2x24xf32>
    %145 = vector.extract_strided_slice %138 {offsets = [0, 24], sizes = [2, 8], strides = [1, 1]} : vector<2x32xf32> to vector<2x8xf32>
    %146 = math.tanh %145 : vector<2x8xf32>
    %147 = vector.extract_strided_slice %144 {offsets = [0, 8], sizes = [2, 8], strides = [1, 1]} : vector<2x24xf32> to vector<2x8xf32>
    %148 = arith.mulf %147, %131 : vector<2x8xf32>
    %149 = vector.extract_strided_slice %144 {offsets = [0, 0], sizes = [2, 8], strides = [1, 1]} : vector<2x24xf32> to vector<2x8xf32>
    %150 = arith.mulf %149, %146 : vector<2x8xf32>
    %151 = arith.addf %148, %150 : vector<2x8xf32>
    %152 = vector.extract_strided_slice %144 {offsets = [0, 16], sizes = [2, 8], strides = [1, 1]} : vector<2x24xf32> to vector<2x8xf32>
    %153 = math.tanh %151 : vector<2x8xf32>
    %154 = arith.mulf %152, %153 : vector<2x8xf32>
    %155 = vector.extract_strided_slice %11 {offsets = [0, 96], sizes = [2, 32], strides = [1, 1]} : vector<2x128xf32> to vector<2x32xf32>
    %156 = arith.truncf %154 : vector<2x8xf32> to vector<2x8xbf16>
    %cst_23 = arith.constant dense<0.000000e+00> : vector<2x32xf32>
    %157 = tpu.matmul %156, %12, %cst_23 {dimension_numbers = #tpu.dot_dimension_numbers<[1], [0], [0], [1], [0, 0, 1, 1], [], []>} : vector<2x8xbf16>, vector<8x32xbf16>, vector<2x32xf32> -> vector<2x32xf32>
    %158 = arith.addf %155, %157 : vector<2x32xf32>
    %159 = vector.extract_strided_slice %158 {offsets = [0, 0], sizes = [2, 24], strides = [1, 1]} : vector<2x32xf32> to vector<2x24xf32>
    %160 = arith.negf %159 : vector<2x24xf32>
    %161 = math.exp %160 : vector<2x24xf32>
    %cst_24 = arith.constant 1.000000e+00 : f32
    %162 = vector.broadcast %cst_24 : f32 to vector<2x24xf32>
    %163 = arith.addf %162, %161 : vector<2x24xf32>
    %164 = arith.divf %162, %163 : vector<2x24xf32>
    %165 = vector.extract_strided_slice %158 {offsets = [0, 24], sizes = [2, 8], strides = [1, 1]} : vector<2x32xf32> to vector<2x8xf32>
    %166 = math.tanh %165 : vector<2x8xf32>
    %167 = vector.extract_strided_slice %164 {offsets = [0, 8], sizes = [2, 8], strides = [1, 1]} : vector<2x24xf32> to vector<2x8xf32>
    %168 = arith.mulf %167, %151 : vector<2x8xf32>
    %169 = vector.extract_strided_slice %164 {offsets = [0, 0], sizes = [2, 8], strides = [1, 1]} : vector<2x24xf32> to vector<2x8xf32>
    %170 = arith.mulf %169, %166 : vector<2x8xf32>
    %171 = arith.addf %168, %170 : vector<2x8xf32>
    %172 = vector.extract_strided_slice %164 {offsets = [0, 16], sizes = [2, 8], strides = [1, 1]} : vector<2x24xf32> to vector<2x8xf32>
    %173 = math.tanh %171 : vector<2x8xf32>
    %174 = arith.mulf %172, %173 : vector<2x8xf32>
    %cst_25 = arith.constant 0.000000e+00 : f32
    %175 = vector.broadcast %cst_25 : f32 to vector<2x8xf32>
    %176 = tpu.concatenate %175, %175, %34, %54, %74 in 1 : vector<2x8xf32>, vector<2x8xf32>, vector<2x8xf32>, vector<2x8xf32>, vector<2x8xf32> -> vector<2x40xf32>
    %177 = tpu.concatenate %175, %34, %54, %74, %94 in 1 : vector<2x8xf32>, vector<2x8xf32>, vector<2x8xf32>, vector<2x8xf32>, vector<2x8xf32> -> vector<2x40xf32>
    %178 = tpu.concatenate %34, %54, %74, %94, %114 in 1 : vector<2x8xf32>, vector<2x8xf32>, vector<2x8xf32>, vector<2x8xf32>, vector<2x8xf32> -> vector<2x40xf32>
    %179 = tpu.concatenate %54, %74, %94, %114, %134 in 1 : vector<2x8xf32>, vector<2x8xf32>, vector<2x8xf32>, vector<2x8xf32>, vector<2x8xf32> -> vector<2x40xf32>
    %180 = tpu.concatenate %74, %94, %114, %134, %154 in 1 : vector<2x8xf32>, vector<2x8xf32>, vector<2x8xf32>, vector<2x8xf32>, vector<2x8xf32> -> vector<2x40xf32>
    %181 = tpu.concatenate %94, %114, %134, %154, %174 in 1 : vector<2x8xf32>, vector<2x8xf32>, vector<2x8xf32>, vector<2x8xf32>, vector<2x8xf32> -> vector<2x40xf32>
    %182 = tpu.concatenate %114, %134, %154, %174, %175 in 1 : vector<2x8xf32>, vector<2x8xf32>, vector<2x8xf32>, vector<2x8xf32>, vector<2x8xf32> -> vector<2x40xf32>
    %183 = tpu.concatenate %134, %154, %174, %175, %175 in 1 : vector<2x8xf32>, vector<2x8xf32>, vector<2x8xf32>, vector<2x8xf32>, vector<2x8xf32> -> vector<2x40xf32>
    %184 = tpu.concatenate %176, %177, %178, %179, %180, %181, %182, %183 in 0 : vector<2x40xf32>, vector<2x40xf32>, vector<2x40xf32>, vector<2x40xf32>, vector<2x40xf32>, vector<2x40xf32>, vector<2x40xf32>, vector<2x40xf32> -> vector<16x40xf32>
    %c32 = arith.constant 32 : index
    %c0_26 = arith.constant 0 : index
    %185 = vector.load %arg2[%c32, %c0_26] : memref<336x128xbf16, #tpu.memory_space<vmem>>, vector<40x32xbf16>
    %c1 = arith.constant 1 : index
    %c0_27 = arith.constant 0 : index
    %186 = vector.load %arg3[%c1, %c0_27] : memref<8x128xf32, #tpu.memory_space<vmem>>, vector<1x32xf32>
    %187 = arith.truncf %184 : vector<16x40xf32> to vector<16x40xbf16>
    %cst_28 = arith.constant dense<0.000000e+00> : vector<16x32xf32>
    %188 = tpu.matmul %187, %185, %cst_28 {dimension_numbers = #tpu.dot_dimension_numbers<[1], [0], [0], [1], [0, 0, 1, 1], [], []>} : vector<16x40xbf16>, vector<40x32xbf16>, vector<16x32xf32> -> vector<16x32xf32>
    %189 = vector.broadcast %186 : vector<1x32xf32> to vector<16x32xf32>
    %190 = arith.addf %188, %189 : vector<16x32xf32>
    %cst_29 = arith.constant 0.000000e+00 : f32
    %191 = vector.broadcast %cst_29 : f32 to vector<16x32xf32>
    %192 = arith.maximumf %190, %191 : vector<16x32xf32>
    %193 = vector.extract_strided_slice %192 {offsets = [0, 0], sizes = [16, 16], strides = [1, 1]} : vector<16x32xf32> to vector<16x16xf32>
    %194 = vector.extract_strided_slice %192 {offsets = [0, 16], sizes = [16, 16], strides = [1, 1]} : vector<16x32xf32> to vector<16x16xf32>
    %195 = arith.maximumf %193, %194 : vector<16x16xf32>
    %196 = vector.extract_strided_slice %195 {offsets = [0, 0], sizes = [2, 16], strides = [1, 1]} : vector<16x16xf32> to vector<2x16xf32>
    %197 = vector.extract_strided_slice %195 {offsets = [4, 0], sizes = [2, 16], strides = [1, 1]} : vector<16x16xf32> to vector<2x16xf32>
    %198 = vector.extract_strided_slice %195 {offsets = [8, 0], sizes = [2, 16], strides = [1, 1]} : vector<16x16xf32> to vector<2x16xf32>
    %199 = vector.extract_strided_slice %195 {offsets = [12, 0], sizes = [2, 16], strides = [1, 1]} : vector<16x16xf32> to vector<2x16xf32>
    %200 = tpu.concatenate %196, %197, %198, %199 in 1 : vector<2x16xf32>, vector<2x16xf32>, vector<2x16xf32>, vector<2x16xf32> -> vector<2x64xf32>
    %201 = vector.extract_strided_slice %195 {offsets = [2, 0], sizes = [2, 16], strides = [1, 1]} : vector<16x16xf32> to vector<2x16xf32>
    %202 = vector.extract_strided_slice %195 {offsets = [6, 0], sizes = [2, 16], strides = [1, 1]} : vector<16x16xf32> to vector<2x16xf32>
    %203 = vector.extract_strided_slice %195 {offsets = [10, 0], sizes = [2, 16], strides = [1, 1]} : vector<16x16xf32> to vector<2x16xf32>
    %204 = vector.extract_strided_slice %195 {offsets = [14, 0], sizes = [2, 16], strides = [1, 1]} : vector<16x16xf32> to vector<2x16xf32>
    %205 = tpu.concatenate %201, %202, %203, %204 in 1 : vector<2x16xf32>, vector<2x16xf32>, vector<2x16xf32>, vector<2x16xf32> -> vector<2x64xf32>
    %206 = arith.maximumf %200, %205 : vector<2x64xf32>
    %c80 = arith.constant 80 : index
    %c0_30 = arith.constant 0 : index
    %207 = vector.load %arg2[%c80, %c0_30] : memref<336x128xbf16, #tpu.memory_space<vmem>>, vector<64x128xbf16>
    %c2 = arith.constant 2 : index
    %c0_31 = arith.constant 0 : index
    %208 = vector.load %arg3[%c2, %c0_31] : memref<8x128xf32, #tpu.memory_space<vmem>>, vector<1x128xf32>
    %209 = arith.truncf %206 : vector<2x64xf32> to vector<2x64xbf16>
    %cst_32 = arith.constant dense<0.000000e+00> : vector<2x128xf32>
    %210 = tpu.matmul %209, %207, %cst_32 {dimension_numbers = #tpu.dot_dimension_numbers<[1], [0], [0], [1], [0, 0, 1, 1], [], []>} : vector<2x64xbf16>, vector<64x128xbf16>, vector<2x128xf32> -> vector<2x128xf32>
    %211 = vector.broadcast %208 : vector<1x128xf32> to vector<2x128xf32>
    %212 = arith.addf %210, %211 : vector<2x128xf32>
    %cst_33 = arith.constant 0.000000e+00 : f32
    %213 = vector.broadcast %cst_33 : f32 to vector<2x128xf32>
    %214 = arith.maximumf %212, %213 : vector<2x128xf32>
    %c144 = arith.constant 144 : index
    %c0_34 = arith.constant 0 : index
    %215 = vector.load %arg2[%c144, %c0_34] : memref<336x128xbf16, #tpu.memory_space<vmem>>, vector<128x64xbf16>
    %c3 = arith.constant 3 : index
    %c0_35 = arith.constant 0 : index
    %216 = vector.load %arg3[%c3, %c0_35] : memref<8x128xf32, #tpu.memory_space<vmem>>, vector<1x64xf32>
    %217 = arith.truncf %214 : vector<2x128xf32> to vector<2x128xbf16>
    %cst_36 = arith.constant dense<0.000000e+00> : vector<2x64xf32>
    %218 = tpu.matmul %217, %215, %cst_36 {dimension_numbers = #tpu.dot_dimension_numbers<[1], [0], [0], [1], [0, 0, 1, 1], [], []>} : vector<2x128xbf16>, vector<128x64xbf16>, vector<2x64xf32> -> vector<2x64xf32>
    %219 = vector.broadcast %216 : vector<1x64xf32> to vector<2x64xf32>
    %220 = arith.addf %218, %219 : vector<2x64xf32>
    %cst_37 = arith.constant 0.000000e+00 : f32
    %221 = vector.broadcast %cst_37 : f32 to vector<2x64xf32>
    %222 = arith.maximumf %220, %221 : vector<2x64xf32>
    %c272 = arith.constant 272 : index
    %c0_38 = arith.constant 0 : index
    %223 = vector.load %arg2[%c272, %c0_38] : memref<336x128xbf16, #tpu.memory_space<vmem>>, vector<64x128xbf16>
    %c4 = arith.constant 4 : index
    %c0_39 = arith.constant 0 : index
    %224 = vector.load %arg3[%c4, %c0_39] : memref<8x128xf32, #tpu.memory_space<vmem>>, vector<1x128xf32>
    %225 = arith.truncf %222 : vector<2x64xf32> to vector<2x64xbf16>
    %cst_40 = arith.constant dense<0.000000e+00> : vector<2x128xf32>
    %226 = tpu.matmul %225, %223, %cst_40 {dimension_numbers = #tpu.dot_dimension_numbers<[1], [0], [0], [1], [0, 0, 1, 1], [], []>} : vector<2x64xbf16>, vector<64x128xbf16>, vector<2x128xf32> -> vector<2x128xf32>
    %227 = vector.broadcast %224 : vector<1x128xf32> to vector<2x128xf32>
    %228 = arith.addf %226, %227 : vector<2x128xf32>
    %c0_41 = arith.constant 0 : index
    %c0_42 = arith.constant 0 : index
    %229 = vector.load %arg4[%c0_41, %c0_42] : memref<2x128xf32, #tpu.memory_space<vmem>>, vector<2x128xf32>
    tpu.vector_store %arg4[%c0_41, %c0_42], %228 {strides = array<i32>} : memref<2x128xf32, #tpu.memory_space<vmem>>, vector<2x128xf32>,
    return
  }
  func.func @transform_0(%arg0: i32) -> (i32, i32) {
    %c0_i32 = arith.constant 0 : i32
    %c0_i32_0 = arith.constant 0 : i32
    return %arg0, %c0_i32 : i32, i32
  }
  func.func @transform_1(%arg0: i32) -> (i32, i32) {
    %c0_i32 = arith.constant 0 : i32
    %c0_i32_0 = arith.constant 0 : i32
    %c0_i32_1 = arith.constant 0 : i32
    return %c0_i32, %c0_i32_0 : i32, i32
  }
  func.func @transform_2(%arg0: i32) -> (i32, i32) {
    %c0_i32 = arith.constant 0 : i32
    %c0_i32_0 = arith.constant 0 : i32
    %c0_i32_1 = arith.constant 0 : i32
    return %c0_i32, %c0_i32_0 : i32, i32
  }
  func.func @transform_3(%arg0: i32) -> (i32, i32) {
    %c0_i32 = arith.constant 0 : i32
    %c0_i32_0 = arith.constant 0 : i32
    return %arg0, %c0_i32 : i32, i32
  }
}

</mosaic_0001>

<llo_original>
// kernel: _lambda_.1
$region0: #{_lambda_.1}
  #allocation0 [shape = 'u32[]', space=smem, size = 0x4, offset = 0x4, fixed_abs, tag = 'smem constant byte address 0x4 - core index']
  #allocation1 [shape = 'u32[72,128]{1,0:T(1,128)}', space=vmem, size = 0x9000, scoped, tag = 'internal scratch']
  %s0 = inlined_call_operand.vmem [shape: f32[2,32], index: 0, kind: input, shape index: {}]
  %s1 = inlined_call_operand.hbm [shape: bf16[336,128], index: 1, kind: input, shape index: {}]
  %s2 = inlined_call_operand.vmem [shape: f32[8,128], index: 2, kind: input, shape index: {}]
  %s3 = inlined_call_operand.hbm [shape: f32[2,128], index: 3, kind: output, shape index: {}]
  %s4 = sld [smem:[#allocation0]]
  $region26: #{_lambda_.1} parent=0
    _
  %s6 = ssub.s32 1, %s4
  %s7 = scalar_select 0, %s6, %s4
  $region1: #{_lambda_.1} parent=0
    #allocation2 [shape = 'u8[86016]{0}', space=vmem, size = 0x15000, scoped, tag = 'input window, operand 1, single buffered']
    #allocation3 [shape = 's32[1]{0}', space=sflag, size = 0x4, scoped, tag = 'scoped memory for _lambda_.1']
    #allocation4 [shape = 's32[1]{0}', space=sflag, size = 0x4, scoped, tag = 'scoped memory for _lambda_.1']
    #allocation5 [shape = 'u8[1024]{0}', space=vmem, size = 0x400, scoped, tag = 'output window, operand 0, single buffered']
    %8 = vsyncpa [#allocation3], 0
    %9 = vsyncpa [#allocation4], 0
    // Predicated region
    $region2: #{_lambda_.1} parent=1 // pred_check
      _
    $region3: #{_lambda_.1} parent=1 // pred_check_branch
      %11 = sbr.rel (0) target = $region5
    $region4: #{_lambda_.1} parent=1 // pred_region
      _
    $region5: #{_lambda_.1} parent=1 // pred_fallthru
      _
    // Predicated region
    $region6: #{_lambda_.1} parent=1 // pred_check
      _
    $region7: #{_lambda_.1} parent=1 // pred_check_branch
      %13 = sbr.rel (0) target = $region9
    $region8: #{_lambda_.1} parent=1 // pred_region
      %15 = vsyncadd [#allocation3], 0
      %s16 = sshll.u32 %s1, 4
      %s17 = int_to_ptr.hbm [resolvable:$true] %s16
      %s18 = sshll.u32 [#allocation2], 4
      %s19 = int_to_ptr.vmem [resolvable:$true] %s18
      %24 = dma.hbm_to_vmem [thread:$0]  %s17, 2688, %s19, [#allocation3], 64, 64, 4
    $region9: #{_lambda_.1} parent=1 // pred_fallthru
      _
    // Predicated region
    $region10: #{_lambda_.1} parent=1 // pred_check
      _
    $region11: #{_lambda_.1} parent=1 // pred_check_branch
      %26 = sbr.rel (0) target = $region13
    $region12: #{_lambda_.1} parent=1 // pred_region
      _
    $region13: #{_lambda_.1} parent=1 // pred_fallthru
      _
    // Predicated region
    $region14: #{_lambda_.1} parent=1 // pred_check
      _
    $region15: #{_lambda_.1} parent=1 // pred_check_branch
      %28 = sbr.rel (0) target = $region17
    $region16: #{_lambda_.1} parent=1 // pred_region
      %30 = dma.done [#allocation3], 2688
    $region17: #{_lambda_.1} parent=1 // pred_fallthru
      _
    %v32 = vld [vmem:[%s0] sm:$0x3]
    %v33 = vpack.c.bf16 %v32, %v32
    %v34 = vld [vmem:[#allocation2] sm:$0xf]
    %v35 = vld [vmem:[#allocation2 + $0x4] sm:$0xf]
    %v36 = vld [vmem:[%s2] sm:$0x1]
    %v37 = vperm.slane %v36, 0
    %v40 = vunpack.c.l.b16 %v34
    %v41 = vunpack.c.l.b16 %v35
    %v42 = vpack.c.b16 %v41, %v40
    %vm44 = vcmask 130048
    %v46 = vsel %vm44, %v33, 0
    %48 = vmatpush.bf16.msra.mxu0 0
    %49 = vmatpush.bf16.msra.mxu0 0
    %50 = vmatpush.bf16.msra.mxu0 0
    %51 = vmatpush.bf16.msra.mxu0 0
    %52 = vmatpush.bf16.msra.mxu0 0
    %53 = vmatpush.bf16.msra.mxu0 0
    %54 = vmatpush.bf16.msra.mxu0 0
    %55 = vmatpush.bf16.msra.mxu0 %v42
    %56 = vmatmul.bf16.gmra.mxu0 %v46
    %v57 = vpop.f32.mrf.mxu0
    %v58 = vadd.f32 %v37, %v57
    %v59 = vpop.f32.mrf.mxu0
    %60 = vdwg.mxu0
    %v62 = vunpack.c.l.b16 %v33
    %v63 = vpack.c.b16 %v62, %v62
    %64 = vrot.lane.b32.xlu0 %v63, 112
    %v65 = vpop.permute.xlu0 %64
    %v67 = vsel %vm44, %v65, 0
    %69 = vmatpush.bf16.msra.mxu0 0
    %70 = vmatpush.bf16.msra.mxu0 0
    %71 = vmatpush.bf16.msra.mxu0 0
    %72 = vmatpush.bf16.msra.mxu0 0
    %73 = vmatpush.bf16.msra.mxu0 0
    %74 = vmatpush.bf16.msra.mxu0 0
    %75 = vmatpush.bf16.msra.mxu0 0
    %76 = vmatpush.bf16.msra.mxu0 %v42
    %77 = vmatmul.bf16.gmra.mxu0 %v67
    %v78 = vpop.f32.mrf.mxu0
    %v79 = vadd.f32 %v37, %v78
    %v80 = vpop.f32.mrf.mxu0
    %81 = vdwg.mxu0
    %v82 = vld [vmem:[#allocation2 + $0x8] sm:$0xf]
    %vm83 = vcmask 64512
    %v85 = vsel %vm83, 0, 0
    %vm87 = vcmask 1043456
    %v89 = vsel %vm87, %v82, 0
    %91 = vmatpush.bf16.msra.mxu0 0
    %92 = vmatpush.bf16.msra.mxu0 0
    %93 = vmatpush.bf16.msra.mxu0 0
    %94 = vmatpush.bf16.msra.mxu0 0
    %95 = vmatpush.bf16.msra.mxu0 0
    %96 = vmatpush.bf16.msra.mxu0 0
    %97 = vmatpush.bf16.msra.mxu0 0
    %98 = vmatpush.bf16.msra.mxu0 %v89
    %99 = vmatmul.bf16.gmra.mxu0 %v85
    %v100 = vpop.f32.mrf.mxu0
    %v101 = vadd.f32 0.0, %v100
    %v102 = vpop.f32.mrf.mxu0
    %103 = vdwg.mxu0
    %v104 = vadd.f32 %v58, %v101
    %v105 = vxor.u32 %v104, 2147483648
    %v106 = vmul.f32 %v105, 1.442695
    %v107 = vpow.pop %v106
    %v108 = vadd.f32 %v107, 1.0
    %v109 = vrcp.pop %v108
    %v110 = vmul.f32 %v108, %v109
    %v111 = vsub.f32 1.0, %v110
    %v112 = vmul.f32 %v109, %v111
    %v113 = vadd.f32 %v109, %v112
    %vm114 = vweird.f32 %v108
    %vm115 = vweird.f32 %v109
    %vm116 = vmor %vm114, %vm115
    %v117 = vsel %vm116, %v109, %v113
    %v118 = vand.u32 2147483647, %v108
    %vm119 = vcmp.eq.f32.partialorder %v118, 8.507059e+37
    %v120 = vand.u32 %v108, 2147483648
    %v121 = vor.u32 1.1754944e-38, %v120
    %v122 = vsel %vm119, %v121, %v117
    %v123 = vmul.f32 1.0, %v122
    %v124 = vtanh.pop %v104
    %v125 = vmul.f32 %v123, 0.0
    %127 = vrot.lane.b32.xlu0 %v124, 104
    %v128 = vpop.permute.xlu0 %127
    %v130 = vmul.f32 %v123, %v128
    %132 = vrot.lane.b32.xlu0 %v130, 8
    %v133 = vpop.permute.xlu0 %132
    %v135 = vadd.f32 %v125, %v133
    %v136 = vtanh.pop %v135
    %138 = vrot.lane.b32.xlu0 %v136, 8
    %v139 = vpop.permute.xlu0 %138
    %v141 = vmul.f32 %v123, %v139
    %v142 = vpack.c.bf16 %v141, %v141
    %144 = vrot.lane.b32.xlu0 %v142, 112
    %v145 = vpop.permute.xlu0 %144
    %v147 = vsel %vm83, %v145, 0
    %149 = vmatpush.bf16.msra.mxu0 0
    %150 = vmatpush.bf16.msra.mxu0 0
    %151 = vmatpush.bf16.msra.mxu0 0
    %152 = vmatpush.bf16.msra.mxu0 0
    %153 = vmatpush.bf16.msra.mxu0 0
    %154 = vmatpush.bf16.msra.mxu0 0
    %155 = vmatpush.bf16.msra.mxu0 0
    %156 = vmatpush.bf16.msra.mxu0 %v89
    %157 = vmatmul.bf16.gmra.mxu0 %v147
    %v158 = vpop.f32.mrf.mxu0
    %v159 = vadd.f32 0.0, %v158
    %v160 = vpop.f32.mrf.mxu0
    %161 = vdwg.mxu0
    %163 = vrot.lane.b32.xlu0 %v159, 32
    %v164 = vpop.permute.xlu0 %163
    %v166 = vadd.f32 %v58, %v164
    %v167 = vxor.u32 %v166, 2147483648
    %v168 = vmul.f32 %v167, 1.442695
    %v169 = vpow.pop %v168
    %v170 = vadd.f32 %v169, 1.0
    %v171 = vrcp.pop %v170
    %v172 = vmul.f32 %v170, %v171
    %v173 = vsub.f32 1.0, %v172
    %v174 = vmul.f32 %v171, %v173
    %v175 = vadd.f32 %v171, %v174
    %vm176 = vweird.f32 %v170
    %vm177 = vweird.f32 %v171
    %vm178 = vmor %vm176, %vm177
    %v179 = vsel %vm178, %v171, %v175
    %v180 = vand.u32 2147483647, %v170
    %vm181 = vcmp.eq.f32.partialorder %v180, 8.507059e+37
    %v182 = vand.u32 %v170, 2147483648
    %v183 = vor.u32 1.1754944e-38, %v182
    %v184 = vsel %vm181, %v183, %v179
    %v185 = vmul.f32 1.0, %v184
    %v186 = vtanh.pop %v166
    %188 = vrot.lane.b32.xlu0 %v135, 32
    %v189 = vpop.permute.xlu0 %188
    %v191 = vmul.f32 %v185, %v189
    %193 = vrot.lane.b32.xlu0 %v186, 104
    %v194 = vpop.permute.xlu0 %193
    %v196 = vmul.f32 %v185, %v194
    %198 = vrot.lane.b32.xlu0 %v196, 8
    %v199 = vpop.permute.xlu0 %198
    %v201 = vadd.f32 %v191, %v199
    %v202 = vtanh.pop %v201
    %204 = vrot.lane.b32.xlu0 %v202, 8
    %v205 = vpop.permute.xlu0 %204
    %v207 = vmul.f32 %v185, %v205
    %v208 = vpack.c.bf16 %v207, %v207
    %210 = vrot.lane.b32.xlu0 %v208, 80
    %v211 = vpop.permute.xlu0 %210
    %v213 = vsel %vm83, %v211, 0
    %215 = vmatpush.bf16.msra.mxu0 0
    %216 = vmatpush.bf16.msra.mxu0 0
    %217 = vmatpush.bf16.msra.mxu0 0
    %218 = vmatpush.bf16.msra.mxu0 0
    %219 = vmatpush.bf16.msra.mxu0 0
    %220 = vmatpush.bf16.msra.mxu0 0
    %221 = vmatpush.bf16.msra.mxu0 0
    %222 = vmatpush.bf16.msra.mxu0 %v89
    %223 = vmatmul.bf16.gmra.mxu0 %v213
    %v224 = vpop.f32.mrf.mxu0
    %v225 = vadd.f32 0.0, %v224
    %v226 = vpop.f32.mrf.mxu0
    %227 = vdwg.mxu0
    %229 = vrot.lane.b32.xlu0 %v225, 64
    %v230 = vpop.permute.xlu0 %229
    %v232 = vadd.f32 %v58, %v230
    %v233 = vxor.u32 %v232, 2147483648
    %v234 = vmul.f32 %v233, 1.442695
    %v235 = vpow.pop %v234
    %v236 = vadd.f32 %v235, 1.0
    %v237 = vrcp.pop %v236
    %v238 = vmul.f32 %v236, %v237
    %v239 = vsub.f32 1.0, %v238
    %v240 = vmul.f32 %v237, %v239
    %v241 = vadd.f32 %v237, %v240
    %vm242 = vweird.f32 %v236
    %vm243 = vweird.f32 %v237
    %vm244 = vmor %vm242, %vm243
    %v245 = vsel %vm244, %v237, %v241
    %v246 = vand.u32 2147483647, %v236
    %vm247 = vcmp.eq.f32.partialorder %v246, 8.507059e+37
    %v248 = vand.u32 %v236, 2147483648
    %v249 = vor.u32 1.1754944e-38, %v248
    %v250 = vsel %vm247, %v249, %v245
    %v251 = vmul.f32 1.0, %v250
    %v252 = vtanh.pop %v232
    %254 = vrot.lane.b32.xlu0 %v201, 32
    %v255 = vpop.permute.xlu0 %254
    %v257 = vmul.f32 %v251, %v255
    %259 = vrot.lane.b32.xlu0 %v252, 104
    %v260 = vpop.permute.xlu0 %259
    %v262 = vmul.f32 %v251, %v260
    %264 = vrot.lane.b32.xlu0 %v262, 8
    %v265 = vpop.permute.xlu0 %264
    %v267 = vadd.f32 %v257, %v265
    %v268 = vtanh.pop %v267
    %270 = vrot.lane.b32.xlu0 %v268, 8
    %v271 = vpop.permute.xlu0 %270
    %v273 = vmul.f32 %v251, %v271
    %v274 = vpack.c.bf16 %v273, %v273
    %276 = vrot.lane.b32.xlu0 %v274, 48
    %v277 = vpop.permute.xlu0 %276
    %v279 = vsel %vm83, %v277, 0
    %281 = vmatpush.bf16.msra.mxu0 0
    %282 = vmatpush.bf16.msra.mxu0 0
    %283 = vmatpush.bf16.msra.mxu0 0
    %284 = vmatpush.bf16.msra.mxu0 0
    %285 = vmatpush.bf16.msra.mxu0 0
    %286 = vmatpush.bf16.msra.mxu0 0
    %287 = vmatpush.bf16.msra.mxu0 0
    %288 = vmatpush.bf16.msra.mxu0 %v89
    %289 = vmatmul.bf16.gmra.mxu0 %v279
    %v290 = vpop.f32.mrf.mxu0
    %v291 = vadd.f32 0.0, %v290
    %v292 = vpop.f32.mrf.mxu0
    %293 = vdwg.mxu0
    %295 = vrot.lane.b32.xlu0 %v291, 96
    %v296 = vpop.permute.xlu0 %295
    %v298 = vadd.f32 %v58, %v296
    %v299 = vxor.u32 %v298, 2147483648
    %v300 = vmul.f32 %v299, 1.442695
    %v301 = vpow.pop %v300
    %v302 = vadd.f32 %v301, 1.0
    %v303 = vrcp.pop %v302
    %v304 = vmul.f32 %v302, %v303
    %v305 = vsub.f32 1.0, %v304
    %v306 = vmul.f32 %v303, %v305
    %v307 = vadd.f32 %v303, %v306
    %vm308 = vweird.f32 %v302
    %vm309 = vweird.f32 %v303
    %vm310 = vmor %vm308, %vm309
    %v311 = vsel %vm310, %v303, %v307
    %v312 = vand.u32 2147483647, %v302
    %vm313 = vcmp.eq.f32.partialorder %v312, 8.507059e+37
    %v314 = vand.u32 %v302, 2147483648
    %v315 = vor.u32 1.1754944e-38, %v314
    %v316 = vsel %vm313, %v315, %v311
    %v317 = vmul.f32 1.0, %v316
    %v318 = vtanh.pop %v298
    %320 = vrot.lane.b32.xlu0 %v267, 32
    %v321 = vpop.permute.xlu0 %320
    %v323 = vmul.f32 %v317, %v321
    %325 = vrot.lane.b32.xlu0 %v318, 104
    %v326 = vpop.permute.xlu0 %325
    %v328 = vmul.f32 %v317, %v326
    %330 = vrot.lane.b32.xlu0 %v328, 8
    %v331 = vpop.permute.xlu0 %330
    %v333 = vadd.f32 %v323, %v331
    %v334 = vtanh.pop %v333
    %336 = vrot.lane.b32.xlu0 %v334, 8
    %v337 = vpop.permute.xlu0 %336
    %v339 = vmul.f32 %v317, %v337
    %v340 = vpack.c.bf16 %v339, %v339
    %342 = vrot.lane.b32.xlu0 %v340, 16
    %v343 = vpop.permute.xlu0 %342
    %v345 = vsel %vm83, %v343, 0
    %347 = vmatpush.bf16.msra.mxu0 0
    %348 = vmatpush.bf16.msra.mxu0 0
    %349 = vmatpush.bf16.msra.mxu0 0
    %350 = vmatpush.bf16.msra.mxu0 0
    %351 = vmatpush.bf16.msra.mxu0 0
    %352 = vmatpush.bf16.msra.mxu0 0
    %353 = vmatpush.bf16.msra.mxu0 0
    %354 = vmatpush.bf16.msra.mxu0 %v89
    %355 = vmatmul.bf16.gmra.mxu0 %v345
    %v356 = vpop.f32.mrf.mxu0
    %v357 = vadd.f32 0.0, %v356
    %v358 = vpop.f32.mrf.mxu0
    %359 = vdwg.mxu0
    %v360 = vadd.f32 %v79, %v357
    %v361 = vxor.u32 %v360, 2147483648
    %v362 = vmul.f32 %v361, 1.442695
    %v363 = vpow.pop %v362
    %v364 = vadd.f32 %v363, 1.0
    %v365 = vrcp.pop %v364
    %v366 = vmul.f32 %v364, %v365
    %v367 = vsub.f32 1.0, %v366
    %v368 = vmul.f32 %v365, %v367
    %v369 = vadd.f32 %v365, %v368
    %vm370 = vweird.f32 %v364
    %vm371 = vweird.f32 %v365
    %vm372 = vmor %vm370, %vm371
    %v373 = vsel %vm372, %v365, %v369
    %v374 = vand.u32 2147483647, %v364
    %vm375 = vcmp.eq.f32.partialorder %v374, 8.507059e+37
    %v376 = vand.u32 %v364, 2147483648
    %v377 = vor.u32 1.1754944e-38, %v376
    %v378 = vsel %vm375, %v377, %v373
    %v379 = vmul.f32 1.0, %v378
    %v380 = vtanh.pop %v360
    %382 = vrot.lane.b32.xlu0 %v333, 32
    %v383 = vpop.permute.xlu0 %382
    %v385 = vmul.f32 %v379, %v383
    %387 = vrot.lane.b32.xlu0 %v380, 104
    %v388 = vpop.permute.xlu0 %387
    %v390 = vmul.f32 %v379, %v388
    %392 = vrot.lane.b32.xlu0 %v390, 8
    %v393 = vpop.permute.xlu0 %392
    %v395 = vadd.f32 %v385, %v393
    %v396 = vtanh.pop %v395
    %398 = vrot.lane.b32.xlu0 %v396, 8
    %v399 = vpop.permute.xlu0 %398
    %v401 = vmul.f32 %v379, %v399
    %v402 = vpack.c.bf16 %v401, %v401
    %404 = vrot.lane.b32.xlu0 %v402, 112
    %v405 = vpop.permute.xlu0 %404
    %v407 = vsel %vm83, %v405, 0
    %409 = vmatpush.bf16.msra.mxu0 0
    %410 = vmatpush.bf16.msra.mxu0 0
    %411 = vmatpush.bf16.msra.mxu0 0
    %412 = vmatpush.bf16.msra.mxu0 0
    %413 = vmatpush.bf16.msra.mxu0 0
    %414 = vmatpush.bf16.msra.mxu0 0
    %415 = vmatpush.bf16.msra.mxu0 0
    %416 = vmatpush.bf16.msra.mxu0 %v89
    %417 = vmatmul.bf16.gmra.mxu0 %v407
    %v418 = vpop.f32.mrf.mxu0
    %v419 = vadd.f32 0.0, %v418
    %v420 = vpop.f32.mrf.mxu0
    %421 = vdwg.mxu0
    %423 = vrot.lane.b32.xlu0 %v419, 32
    %v424 = vpop.permute.xlu0 %423
    %v426 = vadd.f32 %v79, %v424
    %v427 = vxor.u32 %v426, 2147483648
    %v428 = vmul.f32 %v427, 1.442695
    %v429 = vpow.pop %v428
    %v430 = vadd.f32 %v429, 1.0
    %v431 = vrcp.pop %v430
    %v432 = vmul.f32 %v430, %v431
    %v433 = vsub.f32 1.0, %v432
    %v434 = vmul.f32 %v431, %v433
    %v435 = vadd.f32 %v431, %v434
    %vm436 = vweird.f32 %v430
    %vm437 = vweird.f32 %v431
    %vm438 = vmor %vm436, %vm437
    %v439 = vsel %vm438, %v431, %v435
    %v440 = vand.u32 2147483647, %v430
    %vm441 = vcmp.eq.f32.partialorder %v440, 8.507059e+37
    %v442 = vand.u32 %v430, 2147483648
    %v443 = vor.u32 1.1754944e-38, %v442
    %v444 = vsel %vm441, %v443, %v439
    %v445 = vmul.f32 1.0, %v444
    %v446 = vtanh.pop %v426
    %448 = vrot.lane.b32.xlu0 %v395, 32
    %v449 = vpop.permute.xlu0 %448
    %v451 = vmul.f32 %v445, %v449
    %453 = vrot.lane.b32.xlu0 %v446, 104
    %v454 = vpop.permute.xlu0 %453
    %v456 = vmul.f32 %v445, %v454
    %458 = vrot.lane.b32.xlu0 %v456, 8
    %v459 = vpop.permute.xlu0 %458
    %v461 = vadd.f32 %v451, %v459
    %v462 = vtanh.pop %v461
    %464 = vrot.lane.b32.xlu0 %v462, 8
    %v465 = vpop.permute.xlu0 %464
    %v467 = vmul.f32 %v445, %v465
    %v468 = vpack.c.bf16 %v467, %v467
    %470 = vrot.lane.b32.xlu0 %v468, 80
    %v471 = vpop.permute.xlu0 %470
    %v473 = vsel %vm83, %v471, 0
    %475 = vmatpush.bf16.msra.mxu0 0
    %476 = vmatpush.bf16.msra.mxu0 0
    %477 = vmatpush.bf16.msra.mxu0 0
    %478 = vmatpush.bf16.msra.mxu0 0
    %479 = vmatpush.bf16.msra.mxu0 0
    %480 = vmatpush.bf16.msra.mxu0 0
    %481 = vmatpush.bf16.msra.mxu0 0
    %482 = vmatpush.bf16.msra.mxu0 %v89
    %483 = vmatmul.bf16.gmra.mxu0 %v473
    %v484 = vpop.f32.mrf.mxu0
    %v485 = vadd.f32 0.0, %v484
    %v486 = vpop.f32.mrf.mxu0
    %487 = vdwg.mxu0
    %489 = vrot.lane.b32.xlu0 %v485, 64
    %v490 = vpop.permute.xlu0 %489
    %v492 = vadd.f32 %v79, %v490
    %v493 = vxor.u32 %v492, 2147483648
    %v494 = vmul.f32 %v493, 1.442695
    %v495 = vpow.pop %v494
    %v496 = vadd.f32 %v495, 1.0
    %v497 = vrcp.pop %v496
    %v498 = vmul.f32 %v496, %v497
    %v499 = vsub.f32 1.0, %v498
    %v500 = vmul.f32 %v497, %v499
    %v501 = vadd.f32 %v497, %v500
    %vm502 = vweird.f32 %v496
    %vm503 = vweird.f32 %v497
    %vm504 = vmor %vm502, %vm503
    %v505 = vsel %vm504, %v497, %v501
    %v506 = vand.u32 2147483647, %v496
    %vm507 = vcmp.eq.f32.partialorder %v506, 8.507059e+37
    %v508 = vand.u32 %v496, 2147483648
    %v509 = vor.u32 1.1754944e-38, %v508
    %v510 = vsel %vm507, %v509, %v505
    %v511 = vmul.f32 1.0, %v510
    %v512 = vtanh.pop %v492
    %514 = vrot.lane.b32.xlu0 %v461, 32
    %v515 = vpop.permute.xlu0 %514
    %v517 = vmul.f32 %v511, %v515
    %519 = vrot.lane.b32.xlu0 %v512, 104
    %v520 = vpop.permute.xlu0 %519
    %v522 = vmul.f32 %v511, %v520
    %524 = vrot.lane.b32.xlu0 %v522, 8
    %v525 = vpop.permute.xlu0 %524
    %v527 = vadd.f32 %v517, %v525
    %v528 = vtanh.pop %v527
    %530 = vrot.lane.b32.xlu0 %v528, 8
    %v531 = vpop.permute.xlu0 %530
    %v533 = vmul.f32 %v511, %v531
    %v534 = vpack.c.bf16 %v533, %v533
    %536 = vrot.lane.b32.xlu0 %v534, 48
    %v537 = vpop.permute.xlu0 %536
    %v539 = vsel %vm83, %v537, 0
    %541 = vmatpush.bf16.msra.mxu0 0
    %542 = vmatpush.bf16.msra.mxu0 0
    %543 = vmatpush.bf16.msra.mxu0 0
    %544 = vmatpush.bf16.msra.mxu0 0
    %545 = vmatpush.bf16.msra.mxu0 0
    %546 = vmatpush.bf16.msra.mxu0 0
    %547 = vmatpush.bf16.msra.mxu0 0
    %548 = vmatpush.bf16.msra.mxu0 %v89
    %549 = vmatmul.bf16.gmra.mxu0 %v539
    %v550 = vpop.f32.mrf.mxu0
    %v551 = vadd.f32 0.0, %v550
    %v552 = vpop.f32.mrf.mxu0
    %553 = vdwg.mxu0
    %555 = vrot.lane.b32.xlu0 %v551, 96
    %v556 = vpop.permute.xlu0 %555
    %v558 = vadd.f32 %v79, %v556
    %v559 = vxor.u32 %v558, 2147483648
    %v560 = vmul.f32 %v559, 1.442695
    %v561 = vpow.pop %v560
    %v562 = vadd.f32 %v561, 1.0
    %v563 = vrcp.pop %v562
    %v564 = vmul.f32 %v562, %v563
    %v565 = vsub.f32 1.0, %v564
    %v566 = vmul.f32 %v563, %v565
    %v567 = vadd.f32 %v563, %v566
    %vm568 = vweird.f32 %v562
    %vm569 = vweird.f32 %v563
    %vm570 = vmor %vm568, %vm569
    %v571 = vsel %vm570, %v563, %v567
    %v572 = vand.u32 2147483647, %v562
    %vm573 = vcmp.eq.f32.partialorder %v572, 8.507059e+37
    %v574 = vand.u32 %v562, 2147483648
    %v575 = vor.u32 1.1754944e-38, %v574
    %v576 = vsel %vm573, %v575, %v571
    %v577 = vmul.f32 1.0, %v576
    %v578 = vtanh.pop %v558
    %580 = vrot.lane.b32.xlu0 %v527, 32
    %v581 = vpop.permute.xlu0 %580
    %v583 = vmul.f32 %v577, %v581
    %585 = vrot.lane.b32.xlu0 %v578, 104
    %v586 = vpop.permute.xlu0 %585
    %v588 = vmul.f32 %v577, %v586
    %590 = vrot.lane.b32.xlu0 %v588, 8
    %v591 = vpop.permute.xlu0 %590
    %v593 = vadd.f32 %v583, %v591
    %v594 = vtanh.pop %v593
    %596 = vrot.lane.b32.xlu0 %v594, 8
    %v597 = vpop.permute.xlu0 %596
    %v599 = vmul.f32 %v577, %v597
    %601 = vrot.lane.b32.xlu0 %v207, 104
    %v602 = vpop.permute.xlu0 %601
    %605 = vrot.lane.b32.xlu0 %v273, 80
    %v606 = vpop.permute.xlu0 %605
    %v608 = vsel %vm44, 0.0, %v141
    %vm609 = vcmask 195584
    %v610 = vsel %vm609, %v608, %v602
    %vm611 = vcmask 261120
    %v612 = vsel %vm611, %v610, %v606
    %614 = vrot.lane.b32.xlu0 %v141, 120
    %v615 = vpop.permute.xlu0 %614
    %617 = vrot.lane.b32.xlu0 %v207, 96
    %v618 = vpop.permute.xlu0 %617
    %620 = vrot.lane.b32.xlu0 %v273, 72
    %v621 = vpop.permute.xlu0 %620
    %624 = vrot.lane.b32.xlu0 %v339, 48
    %v625 = vpop.permute.xlu0 %624
    %v627 = vsel %vm83, 0.0, %v615
    %v628 = vsel %vm44, %v627, %v618
    %v629 = vsel %vm609, %v628, %v621
    %v630 = vsel %vm611, %v629, %v625
    %631 = vrot.lane.b32.xlu0 %v141, 112
    %v632 = vpop.permute.xlu0 %631
    %634 = vrot.lane.b32.xlu0 %v207, 88
    %v635 = vpop.permute.xlu0 %634
    %637 = vrot.lane.b32.xlu0 %v273, 64
    %v638 = vpop.permute.xlu0 %637
    %640 = vrot.lane.b32.xlu0 %v339, 40
    %v641 = vpop.permute.xlu0 %640
    %644 = vrot.lane.b32.xlu0 %v401, 16
    %v645 = vpop.permute.xlu0 %644
    %v647 = vsel %vm83, %v632, %v635
    %v648 = vsel %vm44, %v647, %v638
    %v649 = vsel %vm609, %v648, %v641
    %v650 = vsel %vm611, %v649, %v645
    %651 = vrot.lane.b32.xlu0 %v207, 80
    %v652 = vpop.permute.xlu0 %651
    %654 = vrot.lane.b32.xlu0 %v273, 56
    %v655 = vpop.permute.xlu0 %654
    %657 = vrot.lane.b32.xlu0 %v339, 32
    %v658 = vpop.permute.xlu0 %657
    %660 = vrot.lane.b32.xlu0 %v401, 8
    %v661 = vpop.permute.xlu0 %660
    %664 = vrot.lane.b32.xlu0 %v467, 112
    %v665 = vpop.permute.xlu0 %664
    %v667 = vsel %vm83, %v652, %v655
    %v668 = vsel %vm44, %v667, %v658
    %v669 = vsel %vm609, %v668, %v661
    %v670 = vsel %vm611, %v669, %v665
    %671 = vrot.lane.b32.xlu0 %v273, 48
    %v672 = vpop.permute.xlu0 %671
    %674 = vrot.lane.b32.xlu0 %v339, 24
    %v675 = vpop.permute.xlu0 %674
    %677 = vrot.lane.b32.xlu0 %v467, 104
    %v678 = vpop.permute.xlu0 %677
    %681 = vrot.lane.b32.xlu0 %v533, 80
    %v682 = vpop.permute.xlu0 %681
    %v684 = vsel %vm83, %v672, %v675
    %v685 = vsel %vm44, %v684, %v401
    %v686 = vsel %vm609, %v685, %v678
    %v687 = vsel %vm611, %v686, %v682
    %688 = vrot.lane.b32.xlu0 %v339, 16
    %v689 = vpop.permute.xlu0 %688
    %691 = vrot.lane.b32.xlu0 %v401, 120
    %v692 = vpop.permute.xlu0 %691
    %694 = vrot.lane.b32.xlu0 %v467, 96
    %v695 = vpop.permute.xlu0 %694
    %697 = vrot.lane.b32.xlu0 %v533, 72
    %v698 = vpop.permute.xlu0 %697
    %701 = vrot.lane.b32.xlu0 %v599, 48
    %v702 = vpop.permute.xlu0 %701
    %v704 = vsel %vm83, %v689, %v692
    %v705 = vsel %vm44, %v704, %v695
    %v706 = vsel %vm609, %v705, %v698
    %v707 = vsel %vm611, %v706, %v702
    %708 = vrot.lane.b32.xlu0 %v401, 112
    %v709 = vpop.permute.xlu0 %708
    %711 = vrot.lane.b32.xlu0 %v467, 88
    %v712 = vpop.permute.xlu0 %711
    %714 = vrot.lane.b32.xlu0 %v533, 64
    %v715 = vpop.permute.xlu0 %714
    %717 = vrot.lane.b32.xlu0 %v599, 40
    %v718 = vpop.permute.xlu0 %717
    %v720 = vsel %vm83, %v709, %v712
    %v721 = vsel %vm44, %v720, %v715
    %v722 = vsel %vm609, %v721, %v718
    %v723 = vsel %vm611, %v722, 0.0
    %724 = vrot.lane.b32.xlu0 %v467, 80
    %v725 = vpop.permute.xlu0 %724
    %727 = vrot.lane.b32.xlu0 %v533, 56
    %v728 = vpop.permute.xlu0 %727
    %730 = vrot.lane.b32.xlu0 %v599, 32
    %v731 = vpop.permute.xlu0 %730
    %v733 = vsel %vm83, %v725, %v728
    %v734 = vsel %vm44, %v733, %v731
    %v735 = vsel %vm609, %v734, 0.0
    %v736 = vsel %vm611, %v735, 0.0
    %v738 = vrot.slane %v630, 6
    %v741 = vrot.slane %v650, 4
    %v744 = vrot.slane %v670, 2
    %v747 = vrot.slane %v707, 6
    %v750 = vrot.slane %v723, 4
    %v753 = vrot.slane %v736, 2
    %vm755 = vcmask 1041408
    %v756 = vsel %vm755, %v612, %v738
    %v757 = vsel %vm87, %v756, %v741
    %vm758 = vcmask 1045504
    %v759 = vsel %vm758, %v757, %v744
    %v760 = vsel %vm755, %v687, %v747
    %v761 = vsel %vm87, %v760, %v750
    %v762 = vsel %vm758, %v761, %v753
    %v763 = vld [vmem:[#allocation2 + $0x10] sm:$0xf]
    %v764 = vld [vmem:[#allocation2 + $0x14] sm:$0xf]
    %v765 = vld [vmem:[#allocation2 + $0x18] sm:$0xf]
    %v766 = vld [vmem:[#allocation2 + $0x1c] sm:$0xf]
    %v767 = vld [vmem:[#allocation2 + $0x20] sm:$0xf]
    %v768 = vld [vmem:[%s2 + $0x1] sm:$0x1]
    %v769 = vpack.c.bf16 %v762, %v759
    %v770 = vperm.slane %v768, 0
    %v776 = vunpack.c.l.b16 %v763
    %v777 = vunpack.c.l.b16 %v764
    %v778 = vunpack.c.l.b16 %v765
    %v779 = vunpack.c.l.b16 %v766
    %v780 = vunpack.c.l.b16 %v767
    %v781 = vpack.c.b16 %v777, %v776
    %v782 = vpack.c.b16 %v779, %v778
    %v783 = vpack.c.b16 %v780, %v780
    %vm786 = vcmask 326656
    %v788 = vsel %vm786, %v769, 0
    %v791 = vsel %vm87, %v783, 0
    %793 = vmatpush.bf16.msra.mxu0 0
    %794 = vmatpush.bf16.msra.mxu0 0
    %795 = vmatpush.bf16.msra.mxu0 0
    %796 = vmatpush.bf16.msra.mxu0 0
    %797 = vmatpush.bf16.msra.mxu0 0
    %798 = vmatpush.bf16.msra.mxu0 %v791
    %799 = vmatpush.bf16.msra.mxu0 %v782
    %800 = vmatpush.bf16.msra.mxu0 %v781
    %801 = vmatmul.bf16.gmra.mxu0 %v788
    %v802 = vpop.f32.mrf.mxu0
    %v803 = vadd.f32 %v770, %v802
    %v804 = vpop.f32.mrf.mxu0
    %v805 = vadd.f32 %v770, %v804
    %806 = vdwg.mxu0
    %v807 = vmax.f32 %v803, 0.0
    %v808 = vmax.f32 %v805, 0.0
    %811 = vrot.lane.b32.xlu0 %v807, 112
    %v812 = vpop.permute.xlu0 %811
    %813 = vrot.lane.b32.xlu0 %v808, 112
    %v814 = vpop.permute.xlu0 %813
    %v817 = vmax.f32 %v807, %v812
    %v818 = vmax.f32 %v808, %v814
    %v820 = vrot.slane %v817, 4
    %821 = vrot.lane.b32.xlu0 %v820, 16
    %v822 = vpop.permute.xlu0 %821
    %825 = vrot.lane.b32.xlu0 %v818, 32
    %v826 = vpop.permute.xlu0 %825
    %v828 = vrot.slane %v818, 4
    %829 = vrot.lane.b32.xlu0 %v828, 48
    %v830 = vpop.permute.xlu0 %829
    %v832 = vsel %vm44, %v817, %v822
    %v833 = vsel %vm611, %v832, %v826
    %vm834 = vcmask 392192
    %v835 = vsel %vm834, %v833, %v830
    %v837 = vrot.slane %v835, 2
    %v839 = vmax.f32 %v835, %v837
    %v840 = vld [vmem:[#allocation2 + $0x28] sm:$0xf]
    %v841 = vld [vmem:[#allocation2 + $0x2c] sm:$0xf]
    %v842 = vld [vmem:[#allocation2 + $0x30] sm:$0xf]
    %v843 = vld [vmem:[#allocation2 + $0x34] sm:$0xf]
    %v844 = vld [vmem:[#allocation2 + $0x38] sm:$0xf]
    %v845 = vld [vmem:[#allocation2 + $0x3c] sm:$0xf]
    %v846 = vld [vmem:[#allocation2 + $0x40] sm:$0xf]
    %v847 = vld [vmem:[#allocation2 + $0x44] sm:$0xf]
    %v848 = vld [vmem:[%s2 + $0x2] sm:$0x1]
    %v849 = vpack.c.bf16 %v839, %v839
    %v850 = vperm.slane %v848, 0
    %v859 = vunpack.c.l.b16 %v840
    %v860 = vunpack.c.l.b16 %v841
    %v861 = vunpack.c.l.b16 %v842
    %v862 = vunpack.c.l.b16 %v843
    %v863 = vunpack.c.l.b16 %v844
    %v864 = vunpack.c.l.b16 %v845
    %v865 = vunpack.c.l.b16 %v846
    %v866 = vunpack.c.l.b16 %v847
    %v867 = vpack.c.b16 %v860, %v859
    %v868 = vpack.c.b16 %v862, %v861
    %v869 = vpack.c.b16 %v864, %v863
    %v870 = vpack.c.b16 %v866, %v865
    %vm875 = vcmask 523264
    %v877 = vsel %vm875, %v849, 0
    %879 = vmatpush.bf16.msra.mxu0 0
    %880 = vmatpush.bf16.msra.mxu0 0
    %881 = vmatpush.bf16.msra.mxu0 0
    %882 = vmatpush.bf16.msra.mxu0 0
    %883 = vmatpush.bf16.msra.mxu0 %v870
    %884 = vmatpush.bf16.msra.mxu0 %v869
    %885 = vmatpush.bf16.msra.mxu0 %v868
    %886 = vmatpush.bf16.msra.mxu0 %v867
    %887 = vmatmul.bf16.gmra.mxu0 %v877
    %v888 = vpop.f32.mrf.mxu0
    %v889 = vadd.f32 %v850, %v888
    %v890 = vpop.f32.mrf.mxu0
    %891 = vdwg.mxu0
    %v892 = vmax.f32 %v889, 0.0
    %v893 = vld [vmem:[#allocation2 + $0x48] sm:$0xf]
    %v894 = vld [vmem:[#allocation2 + $0x4c] sm:$0xf]
    %v895 = vld [vmem:[#allocation2 + $0x50] sm:$0xf]
    %v896 = vld [vmem:[#allocation2 + $0x54] sm:$0xf]
    %v897 = vld [vmem:[#allocation2 + $0x58] sm:$0xf]
    %v898 = vld [vmem:[#allocation2 + $0x5c] sm:$0xf]
    %v899 = vld [vmem:[#allocation2 + $0x60] sm:$0xf]
    %v900 = vld [vmem:[#allocation2 + $0x64] sm:$0xf]
    %v901 = vld [vmem:[#allocation2 + $0x68] sm:$0xf]
    %v902 = vld [vmem:[#allocation2 + $0x6c] sm:$0xf]
    %v903 = vld [vmem:[#allocation2 + $0x70] sm:$0xf]
    %v904 = vld [vmem:[#allocation2 + $0x74] sm:$0xf]
    %v905 = vld [vmem:[#allocation2 + $0x78] sm:$0xf]
    %v906 = vld [vmem:[#allocation2 + $0x7c] sm:$0xf]
    %v907 = vld [vmem:[#allocation2 + $0x80] sm:$0xf]
    %v908 = vld [vmem:[#allocation2 + $0x84] sm:$0xf]
    %v909 = vld [vmem:[%s2 + $0x3] sm:$0x1]
    %v910 = vpack.c.bf16 %v892, %v892
    %v911 = vperm.slane %v909, 0
    %v928 = vunpack.c.l.b16 %v893
    %v929 = vunpack.c.l.b16 %v894
    %v930 = vunpack.c.l.b16 %v895
    %v931 = vunpack.c.l.b16 %v896
    %v932 = vunpack.c.l.b16 %v897
    %v933 = vunpack.c.l.b16 %v898
    %v934 = vunpack.c.l.b16 %v899
    %v935 = vunpack.c.l.b16 %v900
    %v936 = vunpack.c.l.b16 %v901
    %v937 = vunpack.c.l.b16 %v902
    %v938 = vunpack.c.l.b16 %v903
    %v939 = vunpack.c.l.b16 %v904
    %v940 = vunpack.c.l.b16 %v905
    %v941 = vunpack.c.l.b16 %v906
    %v942 = vunpack.c.l.b16 %v907
    %v943 = vunpack.c.l.b16 %v908
    %v944 = vpack.c.b16 %v929, %v928
    %v945 = vpack.c.b16 %v931, %v930
    %v946 = vpack.c.b16 %v933, %v932
    %v947 = vpack.c.b16 %v935, %v934
    %v948 = vpack.c.b16 %v937, %v936
    %v949 = vpack.c.b16 %v939, %v938
    %v950 = vpack.c.b16 %v941, %v940
    %v951 = vpack.c.b16 %v943, %v942
    %960 = vmatpush.bf16.msra.mxu0 %v951
    %961 = vmatpush.bf16.msra.mxu0 %v950
    %962 = vmatpush.bf16.msra.mxu0 %v949
    %963 = vmatpush.bf16.msra.mxu0 %v948
    %964 = vmatpush.bf16.msra.mxu0 %v947
    %965 = vmatpush.bf16.msra.mxu0 %v946
    %966 = vmatpush.bf16.msra.mxu0 %v945
    %967 = vmatpush.bf16.msra.mxu0 %v944
    %968 = vmatmul.bf16.gmra.mxu0 %v910
    %v969 = vpop.f32.mrf.mxu0
    %v970 = vadd.f32 %v911, %v969
    %v971 = vpop.f32.mrf.mxu0
    %972 = vdwg.mxu0
    %v973 = vmax.f32 %v970, 0.0
    %v974 = vld [vmem:[#allocation2 + $0x88] sm:$0xf]
    %v975 = vld [vmem:[#allocation2 + $0x8c] sm:$0xf]
    %v976 = vld [vmem:[#allocation2 + $0x90] sm:$0xf]
    %v977 = vld [vmem:[#allocation2 + $0x94] sm:$0xf]
    %v978 = vld [vmem:[#allocation2 + $0x98] sm:$0xf]
    %v979 = vld [vmem:[#allocation2 + $0x9c] sm:$0xf]
    %v980 = vld [vmem:[#allocation2 + $0xa0] sm:$0xf]
    %v981 = vld [vmem:[#allocation2 + $0xa4] sm:$0xf]
    %v982 = vld [vmem:[%s2 + $0x4] sm:$0x1]
    %v983 = vpack.c.bf16 %v973, %v973
    %v984 = vperm.slane %v982, 0
    %v993 = vunpack.c.l.b16 %v974
    %v994 = vunpack.c.l.b16 %v975
    %v995 = vunpack.c.l.b16 %v976
    %v996 = vunpack.c.l.b16 %v977
    %v997 = vunpack.c.l.b16 %v978
    %v998 = vunpack.c.l.b16 %v979
    %v999 = vunpack.c.l.b16 %v980
    %v1000 = vunpack.c.l.b16 %v981
    %v1001 = vpack.c.b16 %v994, %v993
    %v1002 = vpack.c.b16 %v996, %v995
    %v1003 = vpack.c.b16 %v998, %v997
    %v1004 = vpack.c.b16 %v1000, %v999
    %v1010 = vsel %vm875, %v983, 0
    %1012 = vmatpush.bf16.msra.mxu0 0
    %1013 = vmatpush.bf16.msra.mxu0 0
    %1014 = vmatpush.bf16.msra.mxu0 0
    %1015 = vmatpush.bf16.msra.mxu0 0
    %1016 = vmatpush.bf16.msra.mxu0 %v1004
    %1017 = vmatpush.bf16.msra.mxu0 %v1003
    %1018 = vmatpush.bf16.msra.mxu0 %v1002
    %1019 = vmatpush.bf16.msra.mxu0 %v1001
    %1020 = vmatmul.bf16.gmra.mxu0 %v1010
    %v1021 = vpop.f32.mrf.mxu0
    %v1022 = vadd.f32 %v984, %v1021
    %v1023 = vpop.f32.mrf.mxu0
    %1024 = vdwg.mxu0
    %1025 = vst [vmem:[#allocation5] sm:$0x3] %v1022
    // Predicated region
    $region18: #{_lambda_.1} parent=1 // pred_check
      _
    $region19: #{_lambda_.1} parent=1 // pred_check_branch
      %1027 = sbr.rel (0) target = $region21
    $region20: #{_lambda_.1} parent=1 // pred_region
      %1029 = vsyncadd [#allocation4], 0
      %s1031 = sshll.u32 [#allocation5], 4
      %s1032 = int_to_ptr.vmem [resolvable:$true] %s1031
      %s1033 = sshll.u32 %s3, 4
      %s1034 = int_to_ptr.hbm [resolvable:$true] %s1033
      %1036 = dma.vmem_to_hbm [thread:$0]  %s1032, 32, %s1034, [#allocation4]
    $region21: #{_lambda_.1} parent=1 // pred_fallthru
      _
    // Predicated region
    $region22: #{_lambda_.1} parent=1 // pred_check
      _
    $region23: #{_lambda_.1} parent=1 // pred_check_branch
      %1038 = sbr.rel (0) target = $region25
    $region24: #{_lambda_.1} parent=1 // pred_region
      %1040 = dma.done [#allocation4], 32
    $region25: #{_lambda_.1} parent=1 // pred_fallthru
      _
    %1041 = vsyncpa [#allocation3], 1
    %1042 = vsyncpa [#allocation4], 1

</llo_original>
